<compile_context>
chip_gen: v6e
topology: v6e:2x2x1
jax: 0.10.0
libtpu: 0.0.40
codegen_flags: <defaults>
</compile_context>

<pallas_src>
import math

import jax
import jax.numpy as jnp
from jax.experimental import pallas as pl
from jax.experimental.pallas import tpu as pltpu


def _round_up(x, m):
    return ((x + m - 1) // m) * m


def _wml_kernel(x_ref, t_ref, w_ref, o_ref, acc_ref):
    """Grid = (num_parallel, c_blocks, steps); axis 2 is the reduction axis."""
    j = pl.program_id(2)

    @pl.when(j == 0)
    def _():
        acc_ref[...] = jnp.zeros_like(acc_ref)

    # TODO(synk): if bf16 inputs ever become VALU-bound on v7x, do max(x,0) and
    # x*t in bf16 before widening for log1p/exp/accumulate.
    x = x_ref[...].astype(jnp.float32)          # (tile, tile_c)
    t = t_ref[...].astype(jnp.float32)          # (tile, tile_c)

    # Numerically-stable BCEWithLogits (matches PyTorch):
    #   loss = max(x, 0) - x * t + log(1 + exp(-|x|))
    loss = jnp.maximum(x, 0.0) - x * t + jnp.log1p(jnp.exp(-jnp.abs(x)))

    # Keep a full sublane-tile accumulator: per step only vreg-wise VALU adds,
    # no cross-sublane (XLU) work and no weight multiply in the hot loop.
    tile, tile_c = loss.shape
    acc_ref[...] += loss.reshape(tile // 8, 8, tile_c).sum(axis=0)   # (8, tile_c)

    @pl.when(j == pl.num_programs(2) - 1)
    def _():
        w = w_ref[...].astype(jnp.float32)                           # (1, tile_c)
        col = jnp.sum(acc_ref[...], axis=0, keepdims=True)           # (1, tile_c)
        o_ref[...] = (col * w).reshape(o_ref.shape)                  # (1, 1, tile_c)


def weighted_multilabel_loss(
    outputs,
    targets,
    weights,
    *,
    num_parallel=2,                  # 2 -> both v7x TensorCores; free on v5e/v6e
    tile_n=None,                     # optional manual row-tile override
    tile_c_max=4096,                 # lane-aligned class-block upper bound
    vmem_budget_bytes=10 * 1024 * 1024,  # 2 inputs x 2 pipeline buffers (v5e-safe)
    vmem_limit_bytes=None,           # auto-derived from footprint if None
):
    """outputs, targets: (N, C); weights: (C,). Returns scalar f32 mean loss."""
    N, C = outputs.shape
    assert targets.shape == (N, C)
    assert weights.shape == (C,)
    assert num_parallel >= 1

    x_size = jnp.dtype(outputs.dtype).itemsize
    t_size = jnp.dtype(targets.dtype).itemsize
    sublane = 8 if min(x_size, t_size) >= 4 else 16   # bf16 needs 16-row alignment

    # ---- lane-fold small / non-128-multiple C: (N, C) -> (N/r, r*C) ----------
    r = 128 // math.gcd(C, 128)                       # r == 1 when C % 128 == 0
    if r > 1:
        row_pad = (-N) % r
        if row_pad:
            # x = -1e4, t = 0  ->  max(x,0)=0, -x*t=0, log1p(exp(-1e4))=0 exactly.
            outputs = jnp.pad(outputs, ((0, row_pad), (0, 0)), constant_values=-1e4)
            targets = jnp.pad(targets, ((0, row_pad), (0, 0)), constant_values=0.0)
        n_rows = (N + row_pad) // r
        outputs = outputs.reshape(n_rows, r * C)
        targets = targets.reshape(n_rows, r * C)
        w_fold = jnp.tile(weights.astype(jnp.float32), r)
    else:
        n_rows = N
        w_fold = weights.astype(jnp.float32)
    c_fold = r * C                                    # always a multiple of 128

    # ---- class (lane) tiling --------------------------------------------------
    tile_c_max = max(128, (tile_c_max // 128) * 128)
    tile_c = min(c_fold, tile_c_max)
    c_pad = _round_up(c_fold, tile_c)
    if c_pad != c_fold:
        outputs = jnp.pad(outputs, ((0, 0), (0, c_pad - c_fold)), constant_values=-1e4)
        targets = jnp.pad(targets, ((0, 0), (0, c_pad - c_fold)), constant_values=0.0)
        w_fold = jnp.pad(w_fold, (0, c_pad - c_fold), constant_values=0.0)
    c_blocks = c_pad // tile_c

    # ---- row tiling: size UP to fill the double-buffered input budget --------
    rows_per_part = pl.cdiv(n_rows, num_parallel)
    row_bytes = tile_c * (x_size + t_size)            # both input blocks, per row
    max_tile = max(sublane, (vmem_budget_bytes // (2 * row_bytes)) // sublane * sublane)
    if tile_n is not None:
        max_tile = max(sublane, _round_up(tile_n, sublane))
    tile = min(max_tile, _round_up(rows_per_part, sublane))
    steps = pl.cdiv(rows_per_part, tile)
    tile = _round_up(pl.cdiv(rows_per_part, steps), sublane)   # rebalance: min padding

    total_rows = num_parallel * steps * tile
    if total_rows != n_rows:
        pad = total_rows - n_rows
        outputs = jnp.pad(outputs, ((0, pad), (0, 0)), constant_values=-1e4)
        targets = jnp.pad(targets, ((0, pad), (0, 0)), constant_values=0.0)

    # ---- keep the scoped-VMEM limit consistent with the actual footprint -----
    if vmem_limit_bytes is None:
        in_bufs = 2 * tile * tile_c * (x_size + t_size)      # 2 pipeline buffers/input
        misc = (2 * tile_c * 4          # resident weights row (double-buffered)
                + 2 * tile_c * 4        # output block (double-buffered)
                + 8 * tile_c * 4)       # (8, tile_c) f32 accumulator scratch
        vmem_limit_bytes = in_bufs + misc + (4 << 20)        # + compiler headroom

    w2d = w_fold.reshape(1, c_pad)

    # TODO(synk): add pipeline_mode=pl.Buffered(3) on the input specs if profiling
    # ever shows exposed DMA for very small per-step blocks.
    partials = pl.pallas_call(
        _wml_kernel,
        out_shape=jax.ShapeDtypeStruct((num_parallel, 1, c_pad), jnp.float32),
        grid_spec=pltpu.PrefetchScalarGridSpec(
            num_scalar_prefetch=0,
            grid=(num_parallel, c_blocks, steps),
            in_specs=[
                pl.BlockSpec((tile, tile_c), lambda p, c, j: (p * steps + j, c)),  # logits
                pl.BlockSpec((tile, tile_c), lambda p, c, j: (p * steps + j, c)),  # targets
                pl.BlockSpec((1, tile_c), lambda p, c, j: (0, c)),                 # weights
            ],
            out_specs=pl.BlockSpec((1, 1, tile_c), lambda p, c, j: (p, 0, c)),
            scratch_shapes=[pltpu.VMEM((8, tile_c), jnp.float32)],
        ),
        compiler_params=pltpu.CompilerParams(
            dimension_semantics=("parallel", "parallel", "arbitrary"),
            vmem_limit_bytes=vmem_limit_bytes,
        ),
    )(outputs, targets, w2d)

    # Tiny final reduce (cross-lane + cross-partition/class-block) and mean norm.
    return jnp.sum(partials) / jnp.float32(N * C)


def _reference(outputs, targets, weights):
    x = outputs.astype(jnp.float32)
    t = targets.astype(jnp.float32)
    loss = jnp.maximum(x, 0.0) - x * t + jnp.log1p(jnp.exp(-jnp.abs(x)))
    return jnp.mean(loss * weights.astype(jnp.float32).reshape(1, -1))


if __name__ == "__main__":
    key = jax.random.PRNGKey(0)
    k1, k2, k3 = jax.random.split(key, 3)

    # Small multilabel problem: 64 samples, 256 classes.
    N, C = 64, 256
    outputs = jax.random.normal(k1, (N, C), dtype=jnp.float32)            # logits
    targets = (jax.random.uniform(k2, (N, C)) > 0.5).astype(jnp.float32)  # {0,1}
    weights = jax.random.uniform(k3, (C,), minval=0.5, maxval=1.5).astype(jnp.float32)

    ref = _reference(outputs, targets, weights)

    # 1) default path (num_parallel=2, single class block, budget-sized row tile)
    res1 = jax.block_until_ready(weighted_multilabel_loss(outputs, targets, weights))
    assert jnp.allclose(res1, ref, rtol=1e-5, atol=1e-5), (res1, ref)

    # 2) force multiple class blocks (exercises the C-tiling grid axis)
    res2 = jax.block_until_ready(
        weighted_multilabel_loss(outputs, targets, weights, tile_c_max=128))
    assert jnp.allclose(res2, ref, rtol=1e-5, atol=1e-5), (res2, ref)

    # 3) ragged N and small non-128-multiple C (exercises lane-folding + padding)
    N2, C2 = 52, 40
    o2 = jax.random.normal(k1, (N2, C2), dtype=jnp.float32)
    t2 = (jax.random.uniform(k2, (N2, C2)) > 0.5).astype(jnp.float32)
    w2 = jax.random.uniform(k3, (C2,), minval=0.5, maxval=1.5).astype(jnp.float32)
    ref2 = _reference(o2, t2, w2)
    res3 = jax.block_until_ready(weighted_multilabel_loss(o2, t2, w2))
    assert jnp.allclose(res3, ref2, rtol=1e-5, atol=1e-5), (res3, ref2)

    # 4) bf16 inputs (kernel widens to f32 internally)
    o3 = outputs.astype(jnp.bfloat16)
    t3 = targets.astype(jnp.bfloat16)
    ref3 = _reference(o3, t3, weights)
    res4 = jax.block_until_ready(weighted_multilabel_loss(o3, t3, weights))
    assert jnp.allclose(res4, ref3, rtol=1e-4, atol=1e-4), (res4, ref3)

    print("KERNEL_OK")
</pallas_src>

<mosaic_0001>
module attributes {stable_mosaic.version = 11 : i64} {
  func.func @_wml_kernel(%arg0: i32, %arg1: i32, %arg2: i32, %arg3: memref<32x256xf32, #tpu.memory_space<vmem>>, %arg4: memref<32x256xf32, #tpu.memory_space<vmem>>, %arg5: memref<1x256xf32, #tpu.memory_space<vmem>>, %arg6: memref<1x1x256xf32, #tpu.memory_space<vmem>>, %arg7: memref<8x256xf32, #tpu.memory_space<vmem>>) attributes {dimension_semantics = [#tpu.dimension_semantics<parallel>, #tpu.dimension_semantics<parallel>, #tpu.dimension_semantics<arbitrary>], iteration_bounds = array<i64: 2, 1, 1>, scalar_prefetch = 0 : i64, scratch_operands = 1 : i64, tpu.core_type = #tpu.core_type<tc>, window_params = [{transform_indices = @transform_0, window_bounds = array<i64: 32, 256>}, {transform_indices = @transform_1, window_bounds = array<i64: 32, 256>}, {transform_indices = @transform_2, window_bounds = array<i64: 1, 256>}, {transform_indices = @transform_3, window_bounds = array<i64: 1, 1, 256>}]} {
    %c0_i32 = arith.constant 0 : i32
    %0 = arith.cmpi eq, %arg2, %c0_i32 : i32
    %1 = arith.extui %0 : i1 to i32
    %c0_i32_0 = arith.constant 0 : i32
    %2 = arith.cmpi ne, %1, %c0_i32_0 : i32
    scf.if %2 {
      %cst_12 = arith.constant 0.000000e+00 : f32
      %23 = vector.broadcast %cst_12 : f32 to vector<8x256xf32>
      %c0_13 = arith.constant 0 : index
      %c0_14 = arith.constant 0 : index
      %24 = vector.load %arg7[%c0_13, %c0_14] : memref<8x256xf32, #tpu.memory_space<vmem>>, vector<8x256xf32>
      tpu.vector_store %arg7[%c0_13, %c0_14], %23 {strides = array<i32>} : memref<8x256xf32, #tpu.memory_space<vmem>>, vector<8x256xf32>,
    } else {
    }
    %c0 = arith.constant 0 : index
    %c0_1 = arith.constant 0 : index
    %3 = vector.load %arg3[%c0, %c0_1] : memref<32x256xf32, #tpu.memory_space<vmem>>, vector<32x256xf32>
    %c0_2 = arith.constant 0 : index
    %c0_3 = arith.constant 0 : index
    %4 = vector.load %arg4[%c0_2, %c0_3] : memref<32x256xf32, #tpu.memory_space<vmem>>, vector<32x256xf32>
    %cst = arith.constant 0.000000e+00 : f32
    %5 = vector.broadcast %cst : f32 to vector<32x256xf32>
    %6 = arith.maximumf %3, %5 : vector<32x256xf32>
    %7 = arith.mulf %3, %4 : vector<32x256xf32>
    %8 = arith.subf %6, %7 : vector<32x256xf32>
    %9 = math.absf %3 : vector<32x256xf32>
    %cst_4 = arith.constant 0.000000e+00 : f32
    %10 = vector.broadcast %cst_4 : f32 to vector<32x256xf32>
    %11 = arith.subf %10, %9 : vector<32x256xf32>
    %12 = math.exp %11 : vector<32x256xf32>
    %13 = math.log1p %12 : vector<32x256xf32>
    %14 = arith.addf %8, %13 : vector<32x256xf32>
    %c0_5 = arith.constant 0 : index
    %c0_6 = arith.constant 0 : index
    %15 = vector.load %arg7[%c0_5, %c0_6] : memref<8x256xf32, #tpu.memory_space<vmem>>, vector<8x256xf32>
    %16 = vector.shape_cast %14 : vector<32x256xf32> to vector<4x8x256xf32>
    %cst_7 = arith.constant dense<0.000000e+00> : vector<8x256xf32>
    %17 = vector.multi_reduction <add>, %16, %cst_7 [0] : vector<4x8x256xf32> to vector<8x256xf32>
    %18 = arith.addf %15, %17 : vector<8x256xf32>
    %c0_8 = arith.constant 0 : index
    %c0_9 = arith.constant 0 : index
    %19 = vector.load %arg7[%c0_8, %c0_9] : memref<8x256xf32, #tpu.memory_space<vmem>>, vector<8x256xf32>
    tpu.vector_store %arg7[%c0_8, %c0_9], %18 {strides = array<i32>} : memref<8x256xf32, #tpu.memory_space<vmem>>, vector<8x256xf32>,
    %c0_i32_10 = arith.constant 0 : i32
    %20 = arith.cmpi eq, %arg2, %c0_i32_10 : i32
    %21 = arith.extui %20 : i1 to i32
    %c0_i32_11 = arith.constant 0 : i32
    %22 = arith.cmpi ne, %21, %c0_i32_11 : i32
    scf.if %22 {
      %c0_12 = arith.constant 0 : index
      %c0_13 = arith.constant 0 : index
      %23 = vector.load %arg5[%c0_12, %c0_13] : memref<1x256xf32, #tpu.memory_space<vmem>>, vector<1x256xf32>
      %c0_14 = arith.constant 0 : index
      %c0_15 = arith.constant 0 : index
      %24 = vector.load %arg7[%c0_14, %c0_15] : memref<8x256xf32, #tpu.memory_space<vmem>>, vector<8x256xf32>
      %cst_16 = arith.constant dense<0.000000e+00> : vector<256xf32>
      %25 = vector.multi_reduction <add>, %24, %cst_16 [0] : vector<8x256xf32> to vector<256xf32>
      %26 = vector.shape_cast %25 : vector<256xf32> to vector<1x256xf32>
      %27 = arith.mulf %26, %23 : vector<1x256xf32>
      %28 = vector.shape_cast %27 : vector<1x256xf32> to vector<1x1x256xf32>
      %c0_17 = arith.constant 0 : index
      %c0_18 = arith.constant 0 : index
      %c0_19 = arith.constant 0 : index
      %29 = vector.load %arg6[%c0_17, %c0_18, %c0_19] : memref<1x1x256xf32, #tpu.memory_space<vmem>>, vector<1x1x256xf32>
      tpu.vector_store %arg6[%c0_17, %c0_18, %c0_19], %28 {strides = array<i32>} : memref<1x1x256xf32, #tpu.memory_space<vmem>>, vector<1x1x256xf32>,
    } else {
    }
    return
  }
  func.func @transform_0(%arg0: i32, %arg1: i32, %arg2: i32) -> (i32, i32) {
    %c1_i32 = arith.constant 1 : i32
    %0 = arith.muli %arg0, %c1_i32 : i32
    %1 = arith.addi %0, %arg2 : i32
    %c0_i32 = arith.constant 0 : i32
    return %1, %arg1 : i32, i32
  }
  func.func @transform_1(%arg0: i32, %arg1: i32, %arg2: i32) -> (i32, i32) {
    %c1_i32 = arith.constant 1 : i32
    %0 = arith.muli %arg0, %c1_i32 : i32
    %1 = arith.addi %0, %arg2 : i32
    %c0_i32 = arith.constant 0 : i32
    return %1, %arg1 : i32, i32
  }
  func.func @transform_2(%arg0: i32, %arg1: i32, %arg2: i32) -> (i32, i32) {
    %c0_i32 = arith.constant 0 : i32
    %c0_i32_0 = arith.constant 0 : i32
    return %c0_i32, %arg1 : i32, i32
  }
  func.func @transform_3(%arg0: i32, %arg1: i32, %arg2: i32) -> (i32, i32, i32) {
    %c0_i32 = arith.constant 0 : i32
    %c0_i32_0 = arith.constant 0 : i32
    return %arg0, %c0_i32, %arg1 : i32, i32, i32
  }
}

</mosaic_0001>

<llo_original>
// kernel: tpu_custom_call.1
$region0: #{tpu_custom_call.1}
  #allocation0 [shape = 'u32[]', space=smem, size = 0x4, offset = 0x4, fixed_abs, tag = 'smem constant byte address 0x4 - core index']
  #allocation1 [shape = 'u32[144,128]{1,0:T(1,128)}', space=vmem, size = 0x12000, scoped, tag = 'internal scratch']
  #allocation2 [shape = 'f32[8,256]{1,0:T(8,128)}', space=vmem, size = 0x2000, scoped, tag = 'scratch operand']
  %s0 = inlined_call_operand.hbm [shape: f32[64,256], index: 0, kind: input, shape index: {}]
  %s1 = inlined_call_operand.hbm [shape: f32[64,256], index: 1, kind: input, shape index: {}]
  %s2 = inlined_call_operand.vmem [shape: f32[1,256], index: 2, kind: input, shape index: {}]
  %s3 = inlined_call_operand.hbm [shape: f32[2,1,256], index: 3, kind: output, shape index: {}]
  %s4 = sld [smem:[#allocation0]]
  $region61: #{tpu_custom_call.1} parent=0
    _
  %s6 = ssub.s32 1, %s4
  %s7 = scalar_select 0, %s6, %s4
  $region1: #{tpu_custom_call.1} parent=0
    #allocation3 [shape = 'u8[65536]{0}', space=vmem, size = 0x10000, scoped, tag = 'input window, operand 0']
    #allocation4 [shape = 's32[2]{0}', space=sflag, size = 0x8, scoped, tag = 'scoped memory for tpu_custom_call.1']
    #allocation5 [shape = 's32[2]{0}', space=sflag, size = 0x8, scoped, tag = 'scoped memory for tpu_custom_call.1']
    #allocation6 [shape = 'u8[65536]{0}', space=vmem, size = 0x10000, scoped, tag = 'input window, operand 1']
    #allocation7 [shape = 's32[2]{0}', space=sflag, size = 0x8, scoped, tag = 'scoped memory for tpu_custom_call.1']
    #allocation8 [shape = 'u8[2048]{0}', space=vmem, size = 0x800, scoped, tag = 'output window, operand 0']
    %8 = vsyncpa [#allocation4], 0
    %s9 = scalar_lea.sflag [#allocation4], 1
    %10 = vsyncpa %s9, 0
    %11 = vsyncpa [#allocation7], 0
    %s12 = scalar_lea.sflag [#allocation7], 1
    %13 = vsyncpa %s12, 0
    %14 = vsyncpa [#allocation5], 0
    %s15 = scalar_lea.sflag [#allocation5], 1
    %16 = vsyncpa %s15, 0
    loop: start=0, step=1, limit=4
    $region2: #{tpu_custom_call.1} parent=1 // loop_pre_header
      _
    $region3: #{tpu_custom_call.1} parent=1 // loop_header
      %s18 = sphi 0, %s22
      %p19 = scmp.ge.s32.totalorder %s18, 4
      %s25 = sphi 0, %s44
      %s26 = sphi 0, %s40
      %s27 = sphi 0, %s36
      %s28 = sphi 0, %s25
      %s29 = sphi 0, %s26
      %s30 = sphi 0, %s27
      %s31 = sphi 0, %s28
      %s32 = sphi 0, %s29
      %s33 = sphi 0, %s30
      %s51 = sphi 0, %s53
      %s54 = sphi 0, %s51
      %s55 = sphi 0, %s54
      %s71 = sphi 0, %s55
      %s81 = sphi 0, %s83
      %s84 = sphi 0, %s81
      %s85 = sphi 0, %s84
      %s101 = sphi 0, %s85
      %s107 = sphi 0, %s109
      %s110 = sphi 0, %s107
      %s111 = sphi 0, %s110
      %s127 = sphi 0, %s111
      %s135 = sphi 0, %s137
      %s138 = sphi 0, %s135
      %s139 = sphi 0, %s138
      %s155 = sphi 0, %s139
    $region4: #{tpu_custom_call.1} parent=1 // loop_header_branch
      %21 = sbr.rel (%p19) target = $region8
    $region5: #{tpu_custom_call.1} parent=1 // loop_body
      %s23 = ssub.s32 %s18, 1
      %s24 = ssub.s32 %s18, 2
      %s34 = sadd.s32 1, %s27
      %p35 = scmp.ge.s32.totalorder %s34, 1
      %s36 = scalar_select %p35, 0, %s34
      %s37 = sadd.s32 1, %s26
      %s38 = scalar_select %p35, %s37, %s26
      %p39 = scmp.ge.s32.totalorder %s38, 1
      %s40 = scalar_select %p39, 0, %s38
      %s41 = sadd.s32 1, %s25
      %s42 = scalar_select %p39, %s41, %s25
      %p43 = scmp.ge.s32.totalorder %s42, 2
      %s44 = scalar_select %p43, 0, %s42
      %s45 = sadd.s32 %s25, %s27
      %s46 = sadd.s32 %s44, %s36
      %s47 = ssub.s32 %s45, %s46
      %s48 = ssub.s32 %s26, %s40
      %s49 = sor.u32 %s47, %s48
      %p50 = scmp.eq.s32.totalorder %s49, 0
      %s52 = sadd.s32 %s51, 1
      %s53 = scalar_select %p50, %s51, %s52
      %p56 = pneg %p50
      %p57 = scmp.eq.s32.totalorder %s18, 1
      %p58 = por %p56, %p57
      %p59 = scmp.ne.s32.totalorder %s51, %s54
      %p60 = scmp.eq.s32.totalorder %s18, 0
      %p61 = por %p59, %p60
      %p62 = scmp.ne.s32.totalorder %s51, %s54
      %p63 = scmp.eq.s32.totalorder %s23, 1
      %p64 = por %p62, %p63
      %p65 = scmp.ne.s32.totalorder %s54, %s55
      %p66 = scmp.eq.s32.totalorder %s23, 0
      %p67 = por %p65, %p66
      %p68 = scmp.ne.s32.totalorder %s54, %s55
      %p69 = scmp.eq.s32.totalorder %s24, 1
      %p70 = por %p68, %p69
      %p72 = scmp.ne.s32.totalorder %s55, %s71
      %p73 = scmp.eq.s32.totalorder %s24, 0
      %p74 = por %p72, %p73
      %s75 = sadd.s32 %s25, %s27
      %s76 = sadd.s32 %s44, %s36
      %s77 = ssub.s32 %s75, %s76
      %s78 = ssub.s32 %s26, %s40
      %s79 = sor.u32 %s77, %s78
      %p80 = scmp.eq.s32.totalorder %s79, 0
      %s82 = sadd.s32 %s81, 1
      %s83 = scalar_select %p80, %s81, %s82
      %p86 = pneg %p80
      %p87 = scmp.eq.s32.totalorder %s18, 1
      %p88 = por %p86, %p87
      %p89 = scmp.ne.s32.totalorder %s81, %s84
      %p90 = scmp.eq.s32.totalorder %s18, 0
      %p91 = por %p89, %p90
      %p92 = scmp.ne.s32.totalorder %s81, %s84
      %p93 = scmp.eq.s32.totalorder %s23, 1
      %p94 = por %p92, %p93
      %p95 = scmp.ne.s32.totalorder %s84, %s85
      %p96 = scmp.eq.s32.totalorder %s23, 0
      %p97 = por %p95, %p96
      %p98 = scmp.ne.s32.totalorder %s84, %s85
      %p99 = scmp.eq.s32.totalorder %s24, 1
      %p100 = por %p98, %p99
      %p102 = scmp.ne.s32.totalorder %s85, %s101
      %p103 = scmp.eq.s32.totalorder %s24, 0
      %p104 = por %p102, %p103
      %s105 = ssub.s32 %s26, %s40
      %p106 = scmp.eq.s32.totalorder %s105, 0
      %s108 = sadd.s32 %s107, 1
      %s109 = scalar_select %p106, %s107, %s108
      %p112 = pneg %p106
      %p113 = scmp.eq.s32.totalorder %s18, 1
      %p114 = por %p112, %p113
      %p115 = scmp.ne.s32.totalorder %s107, %s110
      %p116 = scmp.eq.s32.totalorder %s18, 0
      %p117 = por %p115, %p116
      %p118 = scmp.ne.s32.totalorder %s107, %s110
      %p119 = scmp.eq.s32.totalorder %s23, 1
      %p120 = por %p118, %p119
      %p121 = scmp.ne.s32.totalorder %s110, %s111
      %p122 = scmp.eq.s32.totalorder %s23, 0
      %p123 = por %p121, %p122
      %p124 = scmp.ne.s32.totalorder %s110, %s111
      %p125 = scmp.eq.s32.totalorder %s24, 1
      %p126 = por %p124, %p125
      %p128 = scmp.ne.s32.totalorder %s111, %s127
      %p129 = scmp.eq.s32.totalorder %s24, 0
      %p130 = por %p128, %p129
      %s131 = ssub.s32 %s25, %s44
      %s132 = ssub.s32 %s26, %s40
      %s133 = sor.u32 %s131, %s132
      %p134 = scmp.eq.s32.totalorder %s133, 0
      %s136 = sadd.s32 %s135, 1
      %s137 = scalar_select %p134, %s135, %s136
      %p140 = pneg %p134
      %p141 = scmp.eq.s32.totalorder %s18, 1
      %p142 = por %p140, %p141
      %p143 = scmp.ne.s32.totalorder %s135, %s138
      %p144 = scmp.eq.s32.totalorder %s18, 0
      %p145 = por %p143, %p144
      %p146 = scmp.ne.s32.totalorder %s135, %s138
      %p147 = scmp.eq.s32.totalorder %s23, 1
      %p148 = por %p146, %p147
      %p149 = scmp.ne.s32.totalorder %s138, %s139
      %p150 = scmp.eq.s32.totalorder %s23, 0
      %p151 = por %p149, %p150
      %p152 = scmp.ne.s32.totalorder %s138, %s139
      %p153 = scmp.eq.s32.totalorder %s24, 1
      %p154 = por %p152, %p153
      %p156 = scmp.ne.s32.totalorder %s139, %s155
      %p157 = scmp.eq.s32.totalorder %s24, 0
      %p158 = por %p156, %p157
      %p159 = scmp.le.s32.totalorder 1, %s18
      %p160 = scmp.lt.s32.totalorder %s18, 3
      %p161 = pnand %p159, %p160
      %p162 = pneg %p161
      // Predicated region
      $region9: #{tpu_custom_call.1} parent=5 // pred_check
        _
      $region10: #{tpu_custom_call.1} parent=5 // pred_check_branch
        %164 = sbr.rel (%p161) target = $region12
      $region11: #{tpu_custom_call.1} parent=5 // pred_region
        %s165 = ssub.s32 %s18, 1
        // Predicated region
        $region13: #{tpu_custom_call.1} parent=11 // pred_check
          %p166 = pneg %p123
        $region14: #{tpu_custom_call.1} parent=11 // pred_check_branch
          %168 = sbr.rel (%p166) target = $region16
        $region15: #{tpu_custom_call.1} parent=11 // pred_region
          %s169 = smul.u32 2, %s29
          %p170 = scmp.lt.s32.totalorder %s169, 1
          %s171 = scalar_select %p170, %s169, 1
          %s172 = scalar_lea.vmem %s2, %s171
          %s173 = smul.u32 2, %s29
        $region16: #{tpu_custom_call.1} parent=11 // pred_fallthru
          _
      $region12: #{tpu_custom_call.1} parent=5 // pred_fallthru
        _
      %p174 = scmp.lt.s32.totalorder %s18, 2
      // Predicated region
      $region17: #{tpu_custom_call.1} parent=5 // pred_check
        %p175 = pneg %p174
      $region18: #{tpu_custom_call.1} parent=5 // pred_check_branch
        %177 = sbr.rel (%p175) target = $region20
      $region19: #{tpu_custom_call.1} parent=5 // pred_region
        // Predicated region
        $region21: #{tpu_custom_call.1} parent=19 // pred_check
          %p178 = pneg %p61
        $region22: #{tpu_custom_call.1} parent=19 // pred_check_branch
          %180 = sbr.rel (%p178) target = $region24
        $region23: #{tpu_custom_call.1} parent=19 // pred_region
          %s181 = sand.u32 %s51, 1
          %s182 = scalar_lea.sflag [#allocation4], %s181
          %s183 = sand.u32 %s51, 1
          %s184 = smul.addr %s183, 64
          %s185 = scalar_lea.vmem [#allocation3], %s184
          %s186 = sadd.s32 %s25, %s27
          %s187 = smul.u32 4, %s186
          %s188 = smul.u32 2, %s26
          %s190 = ssub.s32 1024, 1024
          %191 = vsyncadd %s182, %s190
          %s192 = smul.addr %s187, 2
          %s193 = sadd.s32 %s188, %s192
          %s194 = smul.addr %s193, 128
          %s195 = scalar_lea.hbm %s0, %s194
          %s196 = sshll.u32 %s185, 4
          %s197 = int_to_ptr.vmem [resolvable:$true] %s196
          %202 = dma.hbm_to_vmem [thread:$0]  %s195, 1024, %s197, %s182, 256, 256, 16
        $region24: #{tpu_custom_call.1} parent=19 // pred_fallthru
          _
        // Predicated region
        $region25: #{tpu_custom_call.1} parent=19 // pred_check
          %p203 = pneg %p91
        $region26: #{tpu_custom_call.1} parent=19 // pred_check_branch
          %205 = sbr.rel (%p203) target = $region28
        $region27: #{tpu_custom_call.1} parent=19 // pred_region
          %s206 = sand.u32 %s81, 1
          %s207 = scalar_lea.sflag [#allocation7], %s206
          %s208 = sand.u32 %s81, 1
          %s209 = smul.addr %s208, 64
          %s210 = scalar_lea.vmem [#allocation6], %s209
          %s211 = sadd.s32 %s25, %s27
          %s212 = smul.u32 4, %s211
          %s213 = smul.u32 2, %s26
          %s215 = ssub.s32 1024, 1024
          %216 = vsyncadd %s207, %s215
          %s217 = smul.addr %s212, 2
          %s218 = sadd.s32 %s213, %s217
          %s219 = smul.addr %s218, 128
          %s220 = scalar_lea.hbm %s1, %s219
          %s221 = sshll.u32 %s210, 4
          %s222 = int_to_ptr.vmem [resolvable:$true] %s221
          %227 = dma.hbm_to_vmem [thread:$0]  %s220, 1024, %s222, %s207, 256, 256, 16
        $region28: #{tpu_custom_call.1} parent=19 // pred_fallthru
          _
      $region20: #{tpu_custom_call.1} parent=5 // pred_fallthru
        _
      %p228 = scmp.le.s32.totalorder 1, %s18
      %p229 = scmp.lt.s32.totalorder %s18, 3
      %p230 = pnand %p228, %p229
      %p231 = pneg %p230
      // Predicated region
      $region29: #{tpu_custom_call.1} parent=5 // pred_check
        _
      $region30: #{tpu_custom_call.1} parent=5 // pred_check_branch
        %233 = sbr.rel (%p230) target = $region32
      $region31: #{tpu_custom_call.1} parent=5 // pred_region
        %s234 = ssub.s32 %s18, 1
        %s235 = sand.u32 %s54, 1
        %s236 = scalar_lea.sflag [#allocation4], %s235
        %s237 = sand.u32 %s54, 1
        %s238 = smul.addr %s237, 64
        %s239 = scalar_lea.vmem [#allocation3], %s238
        // Predicated region
        $region33: #{tpu_custom_call.1} parent=31 // pred_check
          %p240 = pneg %p67
        $region34: #{tpu_custom_call.1} parent=31 // pred_check_branch
          %242 = sbr.rel (%p240) target = $region36
        $region35: #{tpu_custom_call.1} parent=31 // pred_region
          %243 = dma.done %s236, 1024
        $region36: #{tpu_custom_call.1} parent=31 // pred_fallthru
          _
        %s244 = sand.u32 %s84, 1
        %s245 = scalar_lea.sflag [#allocation7], %s244
        %s246 = sand.u32 %s84, 1
        %s247 = smul.addr %s246, 64
        %s248 = scalar_lea.vmem [#allocation6], %s247
        // Predicated region
        $region37: #{tpu_custom_call.1} parent=31 // pred_check
          %p249 = pneg %p97
        $region38: #{tpu_custom_call.1} parent=31 // pred_check_branch
          %251 = sbr.rel (%p249) target = $region40
        $region39: #{tpu_custom_call.1} parent=31 // pred_region
          %252 = dma.done %s245, 1024
        $region40: #{tpu_custom_call.1} parent=31 // pred_fallthru
          _
        %s253 = sand.u32 %s54, 1
        %s254 = scalar_lea.sflag [#allocation4], %s253
        %s255 = sand.u32 %s54, 1
        %s256 = smul.addr %s255, 64
        %s257 = scalar_lea.vmem [#allocation3], %s256
        %p258 = pneg %p67
        %p259 = pneg %p64
        %s260 = sand.u32 %s84, 1
        %s261 = scalar_lea.sflag [#allocation7], %s260
        %s262 = sand.u32 %s84, 1
        %s263 = smul.addr %s262, 64
        %s264 = scalar_lea.vmem [#allocation6], %s263
        %p265 = pneg %p97
        %p266 = pneg %p94
        %s267 = smul.u32 2, %s29
        %p268 = scmp.lt.s32.totalorder %s267, 1
        %s269 = scalar_select %p268, %s267, 1
        %s270 = scalar_lea.vmem %s2, %s269
        %p271 = pneg %p123
        %p272 = pneg %p120
        %p273 = pneg %p151
        %p274 = pneg %p148
        %s275 = sand.u32 %s138, 1
        %s276 = scalar_lea.sflag [#allocation5], %s275
        %s277 = sand.u32 %s138, 1
        %s278 = smul.addr %s277, 2
        %s279 = scalar_lea.vmem [#allocation8], %s278
        %s280 = sadd.s32 %s28, %s30
        %s281 = smul.u32 4, %s280
        %s282 = smul.u32 2, %s29
        %s283 = sadd.s32 %s28, %s30
        %s284 = smul.u32 4, %s283
        %s285 = smul.u32 2, %s29
        %s286 = smul.u32 2, %s29
        %p287 = scmp.lt.s32.totalorder %s286, 1
        %s288 = scalar_select %p287, %s286, 1
        %s289 = scalar_lea.vmem %s2, %s288
        %s290 = smul.u32 2, %s29
        %s291 = smul.u32 2, %s29
        %p292 = scmp.eq.s32.totalorder %s30, 0
        // Predicated region
        $region41: #{tpu_custom_call.1} parent=31 // pred_check
          %p293 = pneg %p292
        $region42: #{tpu_custom_call.1} parent=31 // pred_check_branch
          %295 = sbr.rel (%p293) target = $region44
        $region43: #{tpu_custom_call.1} parent=31 // pred_region
          %296 = vst [vmem:[#allocation2] sm:$0xff] 0.0
          %297 = vst [vmem:[#allocation2 + $0x8] sm:$0xff] 0.0
        $region44: #{tpu_custom_call.1} parent=31 // pred_fallthru
          _
        %v298 = vld [vmem:[%s239] sm:$0xff]
        %v299 = vld [vmem:[%s239 + $0x8] sm:$0xff]
        %v300 = vld [vmem:[%s239 + $0x10] sm:$0xff]
        %v301 = vld [vmem:[%s239 + $0x18] sm:$0xff]
        %v302 = vld [vmem:[%s239 + $0x20] sm:$0xff]
        %v303 = vld [vmem:[%s239 + $0x28] sm:$0xff]
        %v304 = vld [vmem:[%s239 + $0x30] sm:$0xff]
        %v305 = vld [vmem:[%s239 + $0x38] sm:$0xff]
        %v306 = vld [vmem:[%s248] sm:$0xff]
        %v307 = vld [vmem:[%s248 + $0x8] sm:$0xff]
        %v308 = vld [vmem:[%s248 + $0x10] sm:$0xff]
        %v309 = vld [vmem:[%s248 + $0x18] sm:$0xff]
        %v310 = vld [vmem:[%s248 + $0x20] sm:$0xff]
        %v311 = vld [vmem:[%s248 + $0x28] sm:$0xff]
        %v312 = vld [vmem:[%s248 + $0x30] sm:$0xff]
        %v313 = vld [vmem:[%s248 + $0x38] sm:$0xff]
        %v314 = vmax.f32 %v298, 0.0
        %v315 = vmax.f32 %v299, 0.0
        %v316 = vmax.f32 %v300, 0.0
        %v317 = vmax.f32 %v301, 0.0
        %v318 = vmax.f32 %v302, 0.0
        %v319 = vmax.f32 %v303, 0.0
        %v320 = vmax.f32 %v304, 0.0
        %v321 = vmax.f32 %v305, 0.0
        %v322 = vmul.f32 %v298, %v306
        %v323 = vmul.f32 %v299, %v307
        %v324 = vmul.f32 %v300, %v308
        %v325 = vmul.f32 %v301, %v309
        %v326 = vmul.f32 %v302, %v310
        %v327 = vmul.f32 %v303, %v311
        %v328 = vmul.f32 %v304, %v312
        %v329 = vmul.f32 %v305, %v313
        %v330 = vsub.f32 %v314, %v322
        %v331 = vsub.f32 %v315, %v323
        %v332 = vsub.f32 %v316, %v324
        %v333 = vsub.f32 %v317, %v325
        %v334 = vsub.f32 %v318, %v326
        %v335 = vsub.f32 %v319, %v327
        %v336 = vsub.f32 %v320, %v328
        %v337 = vsub.f32 %v321, %v329
        %v338 = vand.u32 2147483647, %v298
        %v339 = vand.u32 2147483647, %v299
        %v340 = vand.u32 2147483647, %v300
        %v341 = vand.u32 2147483647, %v301
        %v342 = vand.u32 2147483647, %v302
        %v343 = vand.u32 2147483647, %v303
        %v344 = vand.u32 2147483647, %v304
        %v345 = vand.u32 2147483647, %v305
        %v346 = vsub.f32 0.0, %v338
        %v347 = vsub.f32 0.0, %v339
        %v348 = vsub.f32 0.0, %v340
        %v349 = vsub.f32 0.0, %v341
        %v350 = vsub.f32 0.0, %v342
        %v351 = vsub.f32 0.0, %v343
        %v352 = vsub.f32 0.0, %v344
        %v353 = vsub.f32 0.0, %v345
        %v354 = vmul.f32 %v346, 1.442695
        %v355 = vpow.pop %v354
        %v356 = vmul.f32 %v347, 1.442695
        %v357 = vpow.pop %v356
        %v358 = vmul.f32 %v348, 1.442695
        %v359 = vpow.pop %v358
        %v360 = vmul.f32 %v349, 1.442695
        %v361 = vpow.pop %v360
        %v362 = vmul.f32 %v350, 1.442695
        %v363 = vpow.pop %v362
        %v364 = vmul.f32 %v351, 1.442695
        %v365 = vpow.pop %v364
        %v366 = vmul.f32 %v352, 1.442695
        %v367 = vpow.pop %v366
        %v368 = vmul.f32 %v353, 1.442695
        %v369 = vpow.pop %v368
        %v370 = vadd.f32 %v355, 1.0
        %v371 = vlog2.pop %v370
        %v372 = vmul.f32 %v371, 0.6931472
        %v373 = vmul.f32 -0.5, %v355
        %v374 = vadd.f32 %v373, 1.0
        %v375 = vmul.f32 %v374, %v355
        %v376 = vand.u32 2147483647, %v355
        %vm377 = vcmp.lt.f32.partialorder %v376, 0.0004427343
        %v378 = vsel %vm377, %v375, %v372
        %v379 = vadd.f32 %v357, 1.0
        %v380 = vlog2.pop %v379
        %v381 = vmul.f32 %v380, 0.6931472
        %v382 = vmul.f32 -0.5, %v357
        %v383 = vadd.f32 %v382, 1.0
        %v384 = vmul.f32 %v383, %v357
        %v385 = vand.u32 2147483647, %v357
        %vm386 = vcmp.lt.f32.partialorder %v385, 0.0004427343
        %v387 = vsel %vm386, %v384, %v381
        %v388 = vadd.f32 %v359, 1.0
        %v389 = vlog2.pop %v388
        %v390 = vmul.f32 %v389, 0.6931472
        %v391 = vmul.f32 -0.5, %v359
        %v392 = vadd.f32 %v391, 1.0
        %v393 = vmul.f32 %v392, %v359
        %v394 = vand.u32 2147483647, %v359
        %vm395 = vcmp.lt.f32.partialorder %v394, 0.0004427343
        %v396 = vsel %vm395, %v393, %v390
        %v397 = vadd.f32 %v361, 1.0
        %v398 = vlog2.pop %v397
        %v399 = vmul.f32 %v398, 0.6931472
        %v400 = vmul.f32 -0.5, %v361
        %v401 = vadd.f32 %v400, 1.0
        %v402 = vmul.f32 %v401, %v361
        %v403 = vand.u32 2147483647, %v361
        %vm404 = vcmp.lt.f32.partialorder %v403, 0.0004427343
        %v405 = vsel %vm404, %v402, %v399
        %v406 = vadd.f32 %v363, 1.0
        %v407 = vlog2.pop %v406
        %v408 = vmul.f32 %v407, 0.6931472
        %v409 = vmul.f32 -0.5, %v363
        %v410 = vadd.f32 %v409, 1.0
        %v411 = vmul.f32 %v410, %v363
        %v412 = vand.u32 2147483647, %v363
        %vm413 = vcmp.lt.f32.partialorder %v412, 0.0004427343
        %v414 = vsel %vm413, %v411, %v408
        %v415 = vadd.f32 %v365, 1.0
        %v416 = vlog2.pop %v415
        %v417 = vmul.f32 %v416, 0.6931472
        %v418 = vmul.f32 -0.5, %v365
        %v419 = vadd.f32 %v418, 1.0
        %v420 = vmul.f32 %v419, %v365
        %v421 = vand.u32 2147483647, %v365
        %vm422 = vcmp.lt.f32.partialorder %v421, 0.0004427343
        %v423 = vsel %vm422, %v420, %v417
        %v424 = vadd.f32 %v367, 1.0
        %v425 = vlog2.pop %v424
        %v426 = vmul.f32 %v425, 0.6931472
        %v427 = vmul.f32 -0.5, %v367
        %v428 = vadd.f32 %v427, 1.0
        %v429 = vmul.f32 %v428, %v367
        %v430 = vand.u32 2147483647, %v367
        %vm431 = vcmp.lt.f32.partialorder %v430, 0.0004427343
        %v432 = vsel %vm431, %v429, %v426
        %v433 = vadd.f32 %v369, 1.0
        %v434 = vlog2.pop %v433
        %v435 = vmul.f32 %v434, 0.6931472
        %v436 = vmul.f32 -0.5, %v369
        %v437 = vadd.f32 %v436, 1.0
        %v438 = vmul.f32 %v437, %v369
        %v439 = vand.u32 2147483647, %v369
        %vm440 = vcmp.lt.f32.partialorder %v439, 0.0004427343
        %v441 = vsel %vm440, %v438, %v435
        %v442 = vadd.f32 %v330, %v378
        %v443 = vadd.f32 %v331, %v387
        %v444 = vadd.f32 %v332, %v396
        %v445 = vadd.f32 %v333, %v405
        %v446 = vadd.f32 %v334, %v414
        %v447 = vadd.f32 %v335, %v423
        %v448 = vadd.f32 %v336, %v432
        %v449 = vadd.f32 %v337, %v441
        %v450 = vld [vmem:[#allocation2] sm:$0xff]
        %v451 = vld [vmem:[#allocation2 + $0x8] sm:$0xff]
        %v452 = vadd.f32 %v442, %v444
        %v453 = vadd.f32 %v452, %v446
        %v454 = vadd.f32 %v453, %v448
        %v455 = vadd.f32 %v443, %v445
        %v456 = vadd.f32 %v455, %v447
        %v457 = vadd.f32 %v456, %v449
        %v458 = vadd.f32 %v450, %v454
        %v459 = vadd.f32 %v451, %v457
        %460 = vst [vmem:[#allocation2] sm:$0xff] %v458
        %461 = vst [vmem:[#allocation2 + $0x8] sm:$0xff] %v459
        // Predicated region
        $region45: #{tpu_custom_call.1} parent=31 // pred_check
          %p462 = pneg %p292
        $region46: #{tpu_custom_call.1} parent=31 // pred_check_branch
          %464 = sbr.rel (%p462) target = $region48
        $region47: #{tpu_custom_call.1} parent=31 // pred_region
          %v465 = vld [vmem:[%s289] sm:$0x3]
          %v466 = vld [vmem:[#allocation2] sm:$0xff]
          %v467 = vld [vmem:[#allocation2 + $0x8] sm:$0xff]
          %v468 = vrot.slane %v466, 4
          %v469 = vadd.f32 %v466, %v468
          %v470 = vrot.slane %v469, 2
          %v471 = vadd.f32 %v469, %v470
          %v472 = vrot.slane %v471, 1
          %v473 = vadd.f32 %v471, %v472
          %v474 = vrot.slane %v467, 4
          %v475 = vadd.f32 %v467, %v474
          %v476 = vrot.slane %v475, 2
          %v477 = vadd.f32 %v475, %v476
          %v478 = vrot.slane %v477, 1
          %v479 = vadd.f32 %v477, %v478
          %v481 = vlaneseq
          %v482 = vshrl.u32 %v481, 7
          %v483 = vsub.s32 0, %v482
          %v484 = vrot.slane %v465, %v483
          %v485 = vlaneseq
          %v486 = vshrl.u32 %v485, 7
          %v487 = vsub.s32 1, %v486
          %v488 = vrot.slane %v465, %v487
          %v491 = vmul.f32 %v473, %v484
          %v492 = vmul.f32 %v479, %v488
          %v495 = vcombine.low %v491, %v492
          %v497 = vunpack.c.l.s4 1966171168
          %v498 = vunpack.c.0.s8 %v497
          %v499 = vlaneseq
          %v500 = vshrl.u32 %v499, 7
          %v501 = vsub.s32 %v498, %v500
          %v502 = vrot.slane %v495, %v501
          %v504 = vunpack.c.l.s4 1966171168
          %v505 = vunpack.c.0.s8 %v504
          %v506 = vlaneseq
          %v507 = vshrl.u32 %v506, 7
          %v508 = vsub.s32 %v505, %v507
          %v509 = vrot.slane %v502, %v508
          %v511 = vlaneseq
          %vm512 = vcmp.ge.s32.totalorder %v511, 0
          %vm513 = vcmp.lt.s32.totalorder %v511, 256
          %vm514 = vmand %vm512, %vm513
          %515 = vst.msk [vmem:[%s279] sm:$0x3] %vm514, %v509
        $region48: #{tpu_custom_call.1} parent=31 // pred_fallthru
          _
        %s516 = sand.u32 %s138, 1
        %s517 = scalar_lea.sflag [#allocation5], %s516
        %s518 = sand.u32 %s138, 1
        %s519 = smul.addr %s518, 2
        %s520 = scalar_lea.vmem [#allocation8], %s519
        // Predicated region
        $region49: #{tpu_custom_call.1} parent=31 // pred_check
          %p521 = pneg %p148
        $region50: #{tpu_custom_call.1} parent=31 // pred_check_branch
          %523 = sbr.rel (%p521) target = $region52
        $region51: #{tpu_custom_call.1} parent=31 // pred_region
          %s524 = smul.u32 2, %s29
          %s526 = ssub.s32 32, 32
          %527 = vsyncadd %s517, %s526
          %s528 = smul.addr %s28, 2
          %s529 = sadd.s32 %s524, %s528
          %s530 = smul.addr %s529, 16
          %s531 = scalar_lea.hbm %s3, %s530
          %s533 = sshll.u32 %s520, 4
          %s534 = int_to_ptr.vmem [resolvable:$true] %s533
          %536 = dma.vmem_to_hbm [thread:$0]  %s534, 32, %s531, %s517
        $region52: #{tpu_custom_call.1} parent=31 // pred_fallthru
          _
      $region32: #{tpu_custom_call.1} parent=5 // pred_fallthru
        _
      %p537 = scmp.le.s32.totalorder 2, %s18
      // Predicated region
      $region53: #{tpu_custom_call.1} parent=5 // pred_check
        %p538 = pneg %p537
      $region54: #{tpu_custom_call.1} parent=5 // pred_check_branch
        %540 = sbr.rel (%p538) target = $region56
      $region55: #{tpu_custom_call.1} parent=5 // pred_region
        %s541 = ssub.s32 %s18, 2
        // Predicated region
        $region57: #{tpu_custom_call.1} parent=55 // pred_check
          %p542 = pneg %p154
        $region58: #{tpu_custom_call.1} parent=55 // pred_check_branch
          %544 = sbr.rel (%p542) target = $region60
        $region59: #{tpu_custom_call.1} parent=55 // pred_region
          %s545 = sand.u32 %s139, 1
          %s546 = scalar_lea.sflag [#allocation5], %s545
          %s547 = sand.u32 %s139, 1
          %s548 = smul.addr %s547, 2
          %s549 = scalar_lea.vmem [#allocation8], %s548
          %550 = dma.done %s546, 32
        $region60: #{tpu_custom_call.1} parent=55 // pred_fallthru
          _
      $region56: #{tpu_custom_call.1} parent=5 // pred_fallthru
        _
    $region6: #{tpu_custom_call.1} parent=1 // loop_footer
      %s22 = sadd.s32 1, %s18
    $region7: #{tpu_custom_call.1} parent=1 // loop_footer_branch
      %17 = sbr.rel target = $region3
    $region8: #{tpu_custom_call.1} parent=1 // loop_exit
      _
    %551 = vsyncpa [#allocation4], 1
    %s552 = scalar_lea.sflag [#allocation4], 1
    %553 = vsyncpa %s552, 1
    %554 = vsyncpa [#allocation7], 1
    %s555 = scalar_lea.sflag [#allocation7], 1
    %556 = vsyncpa %s555, 1
    %557 = vsyncpa [#allocation5], 1
    %s558 = scalar_lea.sflag [#allocation5], 1
    %559 = vsyncpa %s558, 1

</llo_original>
